<compile_context>
chip_gen: v7x
topology: tpu7x:2x2x1
jax: 0.10.0
libtpu: 0.0.40
codegen_flags: <defaults>
</compile_context>

<pallas_src>
import functools

import jax
import jax.numpy as jnp
from jax.experimental import pallas as pl
from jax.experimental.pallas import tpu as pltpu


# ----------------------------------------------------------------------------
# In-kernel helpers
# ----------------------------------------------------------------------------

def _ln_f32(x, g, b, eps):
    """LayerNorm over the last dim. x: [S, D] f32, g/b: [1, D]."""
    mu = jnp.mean(x, axis=-1, keepdims=True)
    var = jnp.mean((x - mu) ** 2, axis=-1, keepdims=True)
    y = (x - mu) * jax.lax.rsqrt(var + eps)
    return y * g.astype(jnp.float32) + b.astype(jnp.float32)


def _heads_attention(q, k, v, heads, dh, scale):
    """q: [Sq, heads*dh], k/v: [Sk, heads*dh] (all f32). Returns [Sq, heads*dh]."""
    outs = []
    for h in range(heads):                      # static python loop, heads is small
        qh = q[:, h * dh:(h + 1) * dh]
        kh = k[:, h * dh:(h + 1) * dh]
        vh = v[:, h * dh:(h + 1) * dh]
        s = jnp.dot(qh, kh.T, preferred_element_type=jnp.float32) * scale
        s = s - jnp.max(s, axis=-1, keepdims=True)
        p = jnp.exp(s)
        p = p * pl.reciprocal(jnp.sum(p, axis=-1, keepdims=True), approx=True)
        outs.append(jnp.dot(p, vh, preferred_element_type=jnp.float32))
    return jnp.concatenate(outs, axis=-1) if heads > 1 else outs[0]


# ----------------------------------------------------------------------------
# Fused block kernels
# ----------------------------------------------------------------------------

def _self_attn_block_kernel(x_ref, ln_g_ref, ln_b_ref, wqkv_ref, bqkv_ref,
                            wo_ref, bo_ref, o_ref, *, heads, dh, scale, eps):
    """PreNorm self-attention block with residual, one batch element per grid step."""
    x = x_ref[0].astype(jnp.float32)                               # [S, D]
    xn = _ln_f32(x, ln_g_ref[...], ln_b_ref[...], eps)
    qkv = jnp.dot(xn, wqkv_ref[...].astype(jnp.float32),
                  preferred_element_type=jnp.float32) + bqkv_ref[...].astype(jnp.float32)
    inner = heads * dh
    q = qkv[:, :inner]
    k = qkv[:, inner:2 * inner]
    v = qkv[:, 2 * inner:]
    attn = _heads_attention(q, k, v, heads, dh, scale)             # [S, inner]
    y = jnp.dot(attn, wo_ref[...].astype(jnp.float32),
                preferred_element_type=jnp.float32) + bo_ref[...].astype(jnp.float32)
    o_ref[0] = (y + x).astype(o_ref.dtype)                         # fused residual


def _cross_attn_block_kernel(x_ref, c_ref, lnx_g_ref, lnx_b_ref, lnc_g_ref, lnc_b_ref,
                             wq_ref, bq_ref, wkv_ref, bkv_ref, wo_ref, bo_ref, o_ref,
                             *, heads, dh, scale, residual, eps):
    """PreNorm cross-attention block (x attends to ctx), one batch element per grid step."""
    x = x_ref[0].astype(jnp.float32)                               # [Sq, Dq]
    c = c_ref[0].astype(jnp.float32)                               # [Sk, Dk]
    xn = _ln_f32(x, lnx_g_ref[...], lnx_b_ref[...], eps)
    cn = _ln_f32(c, lnc_g_ref[...], lnc_b_ref[...], eps)
    q = jnp.dot(xn, wq_ref[...].astype(jnp.float32),
                preferred_element_type=jnp.float32) + bq_ref[...].astype(jnp.float32)
    kv = jnp.dot(cn, wkv_ref[...].astype(jnp.float32),
                 preferred_element_type=jnp.float32) + bkv_ref[...].astype(jnp.float32)
    inner = heads * dh
    k = kv[:, :inner]
    v = kv[:, inner:]
    attn = _heads_attention(q, k, v, heads, dh, scale)             # [Sq, inner]
    y = jnp.dot(attn, wo_ref[...].astype(jnp.float32),
                preferred_element_type=jnp.float32) + bo_ref[...].astype(jnp.float32)
    if residual:
        y = y + x
    o_ref[0] = y.astype(o_ref.dtype)


def _ff_block_kernel(x_ref, ln_g_ref, ln_b_ref, w1_ref, b1_ref, w2_ref, b2_ref, o_ref, *, eps):
    """PreNorm feed-forward block (LN -> W1 -> GELU -> W2 -> +residual) on a token tile."""
    x = x_ref[...].astype(jnp.float32)                             # [tm, D]
    xn = _ln_f32(x, ln_g_ref[...], ln_b_ref[...], eps)
    # TODO(synk): PyTorch nn.GELU uses exact erf; tanh approximation used here for
    #             guaranteed Mosaic lowering (small numerical divergence).
    h = jax.nn.gelu(jnp.dot(xn, w1_ref[...].astype(jnp.float32),
                            preferred_element_type=jnp.float32)
                    + b1_ref[...].astype(jnp.float32), approximate=True)
    y = jnp.dot(h, w2_ref[...].astype(jnp.float32),
                preferred_element_type=jnp.float32) + b2_ref[...].astype(jnp.float32)
    o_ref[...] = (y + x).astype(o_ref.dtype)                       # fused residual


def _linear_kernel(x_ref, w_ref, b_ref, o_ref):
    y = jnp.dot(x_ref[...].astype(jnp.float32), w_ref[...].astype(jnp.float32),
                preferred_element_type=jnp.float32) + b_ref[...].astype(jnp.float32)
    o_ref[...] = y.astype(o_ref.dtype)


# ----------------------------------------------------------------------------
# Pallas wrappers
# ----------------------------------------------------------------------------

_PARALLEL = pltpu.CompilerParams(dimension_semantics=("parallel",))


def _pick_tile(M, cap=512):
    """Largest divisor of M <= cap (prefer multiples of 8), else M (full block)."""
    if M <= cap:
        return M
    for t in range(cap, 7, -1):
        if M % t == 0 and t % 8 == 0:
            return t
    for t in range(cap, 0, -1):
        if M % t == 0:
            return t
    return M


def pallas_linear(x2d, w, b):
    """x2d: [M, K] @ w: [K, N] + b: [N] -> [M, N]; M-tiled, parallel grid."""
    M, K = x2d.shape
    N = w.shape[1]
    tm = _pick_tile(M)
    return pl.pallas_call(
        _linear_kernel,
        out_shape=jax.ShapeDtypeStruct((M, N), x2d.dtype),
        grid=(M // tm,),
        in_specs=[
            pl.BlockSpec((tm, K), lambda i: (i, 0)),
            pl.BlockSpec((K, N), lambda i: (0, 0)),
            pl.BlockSpec((1, N), lambda i: (0, 0)),
        ],
        out_specs=pl.BlockSpec((tm, N), lambda i: (i, 0)),
        compiler_params=_PARALLEL,
    )(x2d, w, b.reshape(1, N))


def linear_3d(x, w, b):
    B, S, D = x.shape
    return pallas_linear(x.reshape(B * S, D), w, b).reshape(B, S, -1)


def self_attn_block(p, x, heads):
    """Fused PreNorm self-attention + residual.  x: [B, S, D]."""
    B, S, D = x.shape
    inner = p["wqkv"].shape[1] // 3
    dh = inner // heads
    kernel = functools.partial(_self_attn_block_kernel, heads=heads, dh=dh,
                               scale=dh ** -0.5, eps=1e-5)
    return pl.pallas_call(
        kernel,
        out_shape=jax.ShapeDtypeStruct((B, S, D), x.dtype),
        grid=(B,),
        in_specs=[
            pl.BlockSpec((1, S, D), lambda b: (b, 0, 0)),
            pl.BlockSpec((1, D), lambda b: (0, 0)),
            pl.BlockSpec((1, D), lambda b: (0, 0)),
            pl.BlockSpec((D, 3 * inner), lambda b: (0, 0)),
            pl.BlockSpec((1, 3 * inner), lambda b: (0, 0)),
            pl.BlockSpec((inner, D), lambda b: (0, 0)),
            pl.BlockSpec((1, D), lambda b: (0, 0)),
        ],
        out_specs=pl.BlockSpec((1, S, D), lambda b: (b, 0, 0)),
        compiler_params=_PARALLEL,
    )(x, p["ln_g"].reshape(1, -1), p["ln_b"].reshape(1, -1),
      p["wqkv"], p["bqkv"].reshape(1, -1), p["wo"], p["bo"].reshape(1, -1))


def cross_attn_block(p, x, ctx, heads, residual):
    """Fused PreNorm cross-attention (+ optional residual). x: [B,Sq,Dq], ctx: [B,Sk,Dk]."""
    B, Sq, Dq = x.shape
    _, Sk, Dk = ctx.shape
    inner = p["wq"].shape[1]
    dh = inner // heads
    kernel = functools.partial(_cross_attn_block_kernel, heads=heads, dh=dh,
                               scale=dh ** -0.5, residual=residual, eps=1e-5)
    return pl.pallas_call(
        kernel,
        out_shape=jax.ShapeDtypeStruct((B, Sq, Dq), x.dtype),
        grid=(B,),
        in_specs=[
            pl.BlockSpec((1, Sq, Dq), lambda b: (b, 0, 0)),
            pl.BlockSpec((1, Sk, Dk), lambda b: (b, 0, 0)),
            pl.BlockSpec((1, Dq), lambda b: (0, 0)),
            pl.BlockSpec((1, Dq), lambda b: (0, 0)),
            pl.BlockSpec((1, Dk), lambda b: (0, 0)),
            pl.BlockSpec((1, Dk), lambda b: (0, 0)),
            pl.BlockSpec((Dq, inner), lambda b: (0, 0)),
            pl.BlockSpec((1, inner), lambda b: (0, 0)),
            pl.BlockSpec((Dk, 2 * inner), lambda b: (0, 0)),
            pl.BlockSpec((1, 2 * inner), lambda b: (0, 0)),
            pl.BlockSpec((inner, Dq), lambda b: (0, 0)),
            pl.BlockSpec((1, Dq), lambda b: (0, 0)),
        ],
        out_specs=pl.BlockSpec((1, Sq, Dq), lambda b: (b, 0, 0)),
        compiler_params=_PARALLEL,
    )(x, ctx,
      p["ln_g"].reshape(1, -1), p["ln_b"].reshape(1, -1),
      p["ln_ctx_g"].reshape(1, -1), p["ln_ctx_b"].reshape(1, -1),
      p["wq"], p["bq"].reshape(1, -1), p["wkv"], p["bkv"].reshape(1, -1),
      p["wo"], p["bo"].reshape(1, -1))


def ff_block(p, x):
    """Fused PreNorm feed-forward + residual.  x: [B, S, D]."""
    B, S, D = x.shape
    M = B * S
    hidden = p["w1"].shape[1]
    tm = _pick_tile(M)
    out = pl.pallas_call(
        functools.partial(_ff_block_kernel, eps=1e-5),
        out_shape=jax.ShapeDtypeStruct((M, D), x.dtype),
        grid=(M // tm,),
        in_specs=[
            pl.BlockSpec((tm, D), lambda i: (i, 0)),
            pl.BlockSpec((1, D), lambda i: (0, 0)),
            pl.BlockSpec((1, D), lambda i: (0, 0)),
            pl.BlockSpec((D, hidden), lambda i: (0, 0)),
            pl.BlockSpec((1, hidden), lambda i: (0, 0)),
            pl.BlockSpec((hidden, D), lambda i: (0, 0)),
            pl.BlockSpec((1, D), lambda i: (0, 0)),
        ],
        out_specs=pl.BlockSpec((tm, D), lambda i: (i, 0)),
        compiler_params=_PARALLEL,
    )(x.reshape(M, D), p["ln_g"].reshape(1, -1), p["ln_b"].reshape(1, -1),
      p["w1"], p["b1"].reshape(1, -1), p["w2"], p["b2"].reshape(1, -1))
    return out.reshape(B, S, D)


# ----------------------------------------------------------------------------
# Forward pass
# ----------------------------------------------------------------------------

def multi_perceiver_sat_forward(params, cfg, multi_modality_data, key):
    # --- MultiPerceiver preprocessing: per-modality embed (+ modality embedding folded
    #     into the bias) and concat along the token axis ---
    tokens = []
    for name in sorted(multi_modality_data.keys()):
        x = multi_modality_data[name]                      # NCHW [B, C, H, W]
        B, C, H, W = x.shape
        t = x.transpose(0, 2, 3, 1).reshape(B, H * W, C)    # -> [B, HW, C]
        emb = params["modalities"][name]
        bias_eff = emb["b"] + emb["mod_emb"]                # fold modality embedding add
        tokens.append(linear_3d(t, emb["w"], bias_eff))
    data = jnp.concatenate(tokens, axis=1)                  # [B, S_total, D_in]
    B = data.shape[0]

    # --- use_learnable_query: z ~ Uniform(0,1), queries = Linear(z) ---
    z = jax.random.uniform(
        key, (B, cfg["query_future_size"], cfg["query_dim"]), dtype=data.dtype)
    queries = linear_3d(z, params["learnable_query"]["w"], params["learnable_query"]["b"])

    # --- PerceiverIO encoder: latents cross-attend to data (fused block) ---
    latents = jnp.broadcast_to(params["latents"][None], (B,) + params["latents"].shape)
    latents = cross_attn_block(params["cross_attn"], latents, data,
                               heads=cfg["cross_heads"], residual=True)
    latents = ff_block(params["cross_ff"], latents)

    # --- latent self-attention stack (fused blocks) ---
    for blk in params["self_blocks"]:
        latents = self_attn_block(blk["attn"], latents, heads=cfg["latent_heads"])
        latents = ff_block(blk["ff"], latents)

    # --- PerceiverIO decoder: queries cross-attend to latents ---
    dec = cross_attn_block(params["decoder_cross_attn"], queries, latents,
                           heads=cfg["decoder_heads"], residual=False)
    dec = ff_block(params["decoder_ff"], dec)
    out = linear_3d(dec, params["to_logits"]["w"], params["to_logits"]["b"])
    return out                                              # [B, Q, logits_dim]


# ----------------------------------------------------------------------------
# Deterministic parameter initialization
# ----------------------------------------------------------------------------

def _lin(key, din, dout):
    w = jax.random.normal(key, (din, dout), jnp.float32) * (din ** -0.5)
    b = jnp.zeros((dout,), jnp.float32)
    return w, b


def _cross_attn_params(key, dq, dk, inner):
    ks = jax.random.split(key, 4)
    wq, bq = _lin(ks[0], dq, inner)
    wkv, bkv = _lin(ks[1], dk, 2 * inner)          # fused K/V projection
    wo, bo = _lin(ks[2], inner, dq)
    return dict(wq=wq, bq=bq, wkv=wkv, bkv=bkv, wo=wo, bo=bo,
                ln_g=jnp.ones((dq,), jnp.float32), ln_b=jnp.zeros((dq,), jnp.float32),
                ln_ctx_g=jnp.ones((dk,), jnp.float32), ln_ctx_b=jnp.zeros((dk,), jnp.float32))


def _self_attn_params(key, d, inner):
    ks = jax.random.split(key, 2)
    wqkv, bqkv = _lin(ks[0], d, 3 * inner)          # fused Q/K/V projection
    wo, bo = _lin(ks[1], inner, d)
    return dict(wqkv=wqkv, bqkv=bqkv, wo=wo, bo=bo,
                ln_g=jnp.ones((d,), jnp.float32), ln_b=jnp.zeros((d,), jnp.float32))


def _ff_params(key, d, mult=2):
    ks = jax.random.split(key, 2)
    w1, b1 = _lin(ks[0], d, d * mult)
    w2, b2 = _lin(ks[1], d * mult, d)
    return dict(w1=w1, b1=b1, w2=w2, b2=b2,
                ln_g=jnp.ones((d,), jnp.float32), ln_b=jnp.zeros((d,), jnp.float32))


def init_params(key, cfg, modality_channels):
    keys = jax.random.split(key, 16)
    p = {"modalities": {}}
    for i, (name, c) in enumerate(sorted(modality_channels.items())):
        k = jax.random.split(keys[0], len(modality_channels) * 2)
        w, b = _lin(k[2 * i], c, cfg["input_dim"])
        mod_emb = 0.02 * jax.random.normal(k[2 * i + 1], (cfg["input_dim"],), jnp.float32)
        p["modalities"][name] = dict(w=w, b=b, mod_emb=mod_emb)
    p["latents"] = 0.02 * jax.random.normal(
        keys[1], (cfg["num_latents"], cfg["latent_dim"]), jnp.float32)
    p["cross_attn"] = _cross_attn_params(keys[2], cfg["latent_dim"], cfg["input_dim"],
                                         cfg["cross_heads"] * cfg["cross_dim_head"])
    p["cross_ff"] = _ff_params(keys[3], cfg["latent_dim"])
    p["self_blocks"] = []
    for d in range(cfg["depth"]):
        kk = jax.random.split(keys[4 + d], 2)
        p["self_blocks"].append(dict(
            attn=_self_attn_params(kk[0], cfg["latent_dim"],
                                   cfg["latent_heads"] * cfg["latent_dim_head"]),
            ff=_ff_params(kk[1], cfg["latent_dim"]),
        ))
    p["decoder_cross_attn"] = _cross_attn_params(
        keys[10], cfg["query_dim"], cfg["latent_dim"],
        cfg["decoder_heads"] * cfg["decoder_dim_head"])
    p["decoder_ff"] = _ff_params(keys[11], cfg["query_dim"])
    w, b = _lin(keys[12], cfg["query_dim"], cfg["logits_dim"])
    p["to_logits"] = dict(w=w, b=b)
    w, b = _lin(keys[13], cfg["query_dim"], cfg["query_dim"])
    p["learnable_query"] = dict(w=w, b=b)
    return p


# ----------------------------------------------------------------------------
# Main
# ----------------------------------------------------------------------------

if __name__ == "__main__":
    cfg = dict(
        input_dim=32,
        num_latents=16,
        latent_dim=64,
        cross_heads=1, cross_dim_head=32,
        latent_heads=4, latent_dim_head=16,
        depth=2,
        decoder_heads=1, decoder_dim_head=32,
        query_dim=32,
        output_shape=(2, 4, 4),     # -> query_future_size = 32
        logits_dim=16,
    )
    cfg["query_future_size"] = int(
        cfg["output_shape"][0] * cfg["output_shape"][1] * cfg["output_shape"][2])

    root = jax.random.PRNGKey(0)
    k_param, k_sat, k_hrv, k_query = jax.random.split(root, 4)

    B, H, W = 2, 8, 8
    multi_modality_data = {
        "sat": jax.random.normal(k_sat, (B, 3, H, W), jnp.float32),   # NCHW
        "hrv": jax.random.normal(k_hrv, (B, 1, H, W), jnp.float32),   # NCHW
    }
    modality_channels = {name: x.shape[1] for name, x in multi_modality_data.items()}

    params = init_params(k_param, cfg, modality_channels)

    out = multi_perceiver_sat_forward(params, cfg, multi_modality_data, k_query)
    out = jax.block_until_ready(out)

    assert out.shape == (B, cfg["query_future_size"], cfg["logits_dim"]), out.shape
    assert bool(jnp.all(jnp.isfinite(out)))
    print("KERNEL_OK")
</pallas_src>

<mosaic_0001>
module attributes {stable_mosaic.version = 11 : i64} {
  func.func @_linear_kernel(%arg0: i32, %arg1: memref<128x1xf32, #tpu.memory_space<vmem>>, %arg2: memref<1x32xf32, #tpu.memory_space<vmem>>, %arg3: memref<1x32xf32, #tpu.memory_space<vmem>>, %arg4: memref<128x32xf32, #tpu.memory_space<vmem>>) attributes {dimension_semantics = [#tpu.dimension_semantics<parallel>], iteration_bounds = array<i64: 1>, scalar_prefetch = 0 : i64, scratch_operands = 0 : i64, tpu.core_type = #tpu.core_type<tc>, window_params = [{transform_indices = @transform_0, window_bounds = array<i64: 128, 1>}, {pipeline_mode = #tpu.pipeline_mode<synchronous>, transform_indices = @transform_1, window_bounds = array<i64: 1, 32>}, {pipeline_mode = #tpu.pipeline_mode<synchronous>, transform_indices = @transform_2, window_bounds = array<i64: 1, 32>}, {transform_indices = @transform_3, window_bounds = array<i64: 128, 32>}]} {
    %c0 = arith.constant 0 : index
    %c0_0 = arith.constant 0 : index
    %0 = vector.load %arg1[%c0, %c0_0] : memref<128x1xf32, #tpu.memory_space<vmem>>, vector<128x1xf32>
    %c0_1 = arith.constant 0 : index
    %c0_2 = arith.constant 0 : index
    %1 = vector.load %arg2[%c0_1, %c0_2] : memref<1x32xf32, #tpu.memory_space<vmem>>, vector<1x32xf32>
    %cst = arith.constant dense<0.000000e+00> : vector<128x32xf32>
    %2 = tpu.matmul %0, %1, %cst {dimension_numbers = #tpu.dot_dimension_numbers<[1], [0], [0], [1], [0, 0, 1, 1], [], []>} : vector<128x1xf32>, vector<1x32xf32>, vector<128x32xf32> -> vector<128x32xf32>
    %c0_3 = arith.constant 0 : index
    %c0_4 = arith.constant 0 : index
    %3 = vector.load %arg3[%c0_3, %c0_4] : memref<1x32xf32, #tpu.memory_space<vmem>>, vector<1x32xf32>
    %4 = vector.broadcast %3 : vector<1x32xf32> to vector<128x32xf32>
    %5 = arith.addf %2, %4 : vector<128x32xf32>
    %c0_5 = arith.constant 0 : index
    %c0_6 = arith.constant 0 : index
    %6 = vector.load %arg4[%c0_5, %c0_6] : memref<128x32xf32, #tpu.memory_space<vmem>>, vector<128x32xf32>
    tpu.vector_store %arg4[%c0_5, %c0_6], %5 {strides = array<i32>} : memref<128x32xf32, #tpu.memory_space<vmem>>, vector<128x32xf32>,
    return
  }
  func.func @transform_0(%arg0: i32) -> (i32, i32) {
    %c0_i32 = arith.constant 0 : i32
    %c0_i32_0 = arith.constant 0 : i32
    return %arg0, %c0_i32 : i32, i32
  }
  func.func @transform_1(%arg0: i32) -> (i32, i32) {
    %c0_i32 = arith.constant 0 : i32
    %c0_i32_0 = arith.constant 0 : i32
    %c0_i32_1 = arith.constant 0 : i32
    return %c0_i32, %c0_i32_0 : i32, i32
  }
  func.func @transform_2(%arg0: i32) -> (i32, i32) {
    %c0_i32 = arith.constant 0 : i32
    %c0_i32_0 = arith.constant 0 : i32
    %c0_i32_1 = arith.constant 0 : i32
    return %c0_i32, %c0_i32_0 : i32, i32
  }
  func.func @transform_3(%arg0: i32) -> (i32, i32) {
    %c0_i32 = arith.constant 0 : i32
    %c0_i32_0 = arith.constant 0 : i32
    return %arg0, %c0_i32 : i32, i32
  }
}

</mosaic_0001>

<llo_original>
// kernel: tpu_custom_call.1
$region0: #{tpu_custom_call.1}
  #allocation0 [shape = 'u32[]', space=smem, size = 0x4, offset = 0x4, fixed_abs, tag = 'smem constant byte address 0x4 - core index']
  #allocation1 [shape = 'u32[144,128]{1,0:T(1,128)}', space=vmem, size = 0x12000, scoped, tag = 'internal scratch']
  %s0 = inlined_call_operand.vmem [shape: f32[128,1], index: 0, kind: input, shape index: {}]
  %s1 = inlined_call_operand.vmem [shape: f32[1,32], index: 1, kind: input, shape index: {}]
  %s2 = inlined_call_operand.vmem [shape: f32[1,32], index: 2, kind: input, shape index: {}]
  %s3 = inlined_call_operand.vmem [shape: f32[128,32], index: 3, kind: output, shape index: {}]
  %s4 = sld [smem:[#allocation0]]
  $region22: #{tpu_custom_call.1} parent=0
    _
  %s6 = ssub.s32 1, %s4
  %s7 = scalar_select 0, %s6, %s4
  // Predicated region
  $region2: #{tpu_custom_call.1} parent=0 // pred_check
    _
  $region3: #{tpu_custom_call.1} parent=0 // pred_check_branch
    %9 = sbr.rel (0) target = $region5
  $region4: #{tpu_custom_call.1} parent=0 // pred_region
    _
  $region5: #{tpu_custom_call.1} parent=0 // pred_fallthru
    _
  // Predicated region
  $region6: #{tpu_custom_call.1} parent=0 // pred_check
    _
  $region7: #{tpu_custom_call.1} parent=0 // pred_check_branch
    %11 = sbr.rel (0) target = $region9
  $region8: #{tpu_custom_call.1} parent=0 // pred_region
    _
  $region9: #{tpu_custom_call.1} parent=0 // pred_fallthru
    _
  // Predicated region
  $region10: #{tpu_custom_call.1} parent=0 // pred_check
    _
  $region11: #{tpu_custom_call.1} parent=0 // pred_check_branch
    %13 = sbr.rel (0) target = $region13
  $region12: #{tpu_custom_call.1} parent=0 // pred_region
    _
  $region13: #{tpu_custom_call.1} parent=0 // pred_fallthru
    _
  %v14 = vld [vmem:[%s0] sm:$0xff]
  %v15 = vld [vmem:[%s0 + $0x8] sm:$0xff]
  %v16 = vld [vmem:[%s0 + $0x10] sm:$0xff]
  %v17 = vld [vmem:[%s0 + $0x18] sm:$0xff]
  %v18 = vld [vmem:[%s0 + $0x20] sm:$0xff]
  %v19 = vld [vmem:[%s0 + $0x28] sm:$0xff]
  %v20 = vld [vmem:[%s0 + $0x30] sm:$0xff]
  %v21 = vld [vmem:[%s0 + $0x38] sm:$0xff]
  %v22 = vld [vmem:[%s0 + $0x40] sm:$0xff]
  %v23 = vld [vmem:[%s0 + $0x48] sm:$0xff]
  %v24 = vld [vmem:[%s0 + $0x50] sm:$0xff]
  %v25 = vld [vmem:[%s0 + $0x58] sm:$0xff]
  %v26 = vld [vmem:[%s0 + $0x60] sm:$0xff]
  %v27 = vld [vmem:[%s0 + $0x68] sm:$0xff]
  %v28 = vld [vmem:[%s0 + $0x70] sm:$0xff]
  %v29 = vld [vmem:[%s0 + $0x78] sm:$0xff]
  %v30 = vld [vmem:[%s1] sm:$0x1]
  %v31 = vld [vmem:[%s2] sm:$0x1]
  %v33 = vlaneseq
  %v34 = vshrl.u32 %v33, 7
  %v35 = vsub.s32 0, %v34
  %v36 = vrot.slane %v31, %v35
  %vm38 = vcmask 7168
  %v40 = vsel %vm38, %v14, 0
  %v43 = vsel %vm38, %v15, 0
  %v46 = vsel %vm38, %v16, 0
  %v49 = vsel %vm38, %v17, 0
  %v52 = vsel %vm38, %v18, 0
  %v55 = vsel %vm38, %v19, 0
  %v58 = vsel %vm38, %v20, 0
  %v61 = vsel %vm38, %v21, 0
  %v64 = vsel %vm38, %v22, 0
  %v67 = vsel %vm38, %v23, 0
  %v70 = vsel %vm38, %v24, 0
  %v73 = vsel %vm38, %v25, 0
  %v76 = vsel %vm38, %v26, 0
  %v79 = vsel %vm38, %v27, 0
  %v82 = vsel %vm38, %v28, 0
  %v85 = vsel %vm38, %v29, 0
  %vm87 = vcmask 1040384
  %v89 = vsel %vm87, %v30, 0
  %91 = vmatprep.subr.mxu0 0.0
  %92 = vmatpush1.msra.mxu0 %v89
  %93 = vmatprep.subr.mxu0 0.0
  %94 = vmatpush1.msra.mxu0 0.0
  %95 = vmatprep.subr.mxu0 0.0
  %96 = vmatpush1.msra.mxu0 0.0
  %97 = vmatprep.subr.mxu0 0.0
  %98 = vmatpush1.msra.mxu0 0.0
  %99 = vmatprep.subr.mxu0 0.0
  %100 = vmatpush1.msra.mxu0 0.0
  %101 = vmatprep.subr.mxu0 0.0
  %102 = vmatpush1.msra.mxu0 0.0
  %103 = vmatprep.subr.mxu0 0.0
  %104 = vmatpush1.msra.mxu0 0.0
  %105 = vmatprep.subr.mxu0 0.0
  %106 = vmatpush1.msra.mxu0 0.0
  %107 = vmatprep.subr.mxu0 0.0
  %108 = vmatpush1.msra.mxu0 0.0
  %109 = vmatprep.subr.mxu0 0.0
  %110 = vmatpush1.msra.mxu0 0.0
  %111 = vmatprep.subr.mxu0 0.0
  %112 = vmatpush1.msra.mxu0 0.0
  %113 = vmatprep.subr.mxu0 0.0
  %114 = vmatpush1.msra.mxu0 0.0
  %115 = vmatprep.subr.mxu0 0.0
  %116 = vmatpush1.msra.mxu0 0.0
  %117 = vmatprep.subr.mxu0 0.0
  %118 = vmatpush1.msra.mxu0 0.0
  %119 = vmatprep.subr.mxu0 0.0
  %120 = vmatpush1.msra.mxu0 0.0
  %121 = vmatprep.subr.mxu0 0.0
  %122 = vmatpush1.msra.mxu0 0.0
  %123 = vmatprep.subr.mxu0 0.0
  %124 = vmatpush1.msra.mxu0 0.0
  %125 = vmatprep.subr.mxu0 0.0
  %126 = vmatpush1.msra.mxu0 0.0
  %127 = vmatprep.subr.mxu0 0.0
  %128 = vmatpush1.msra.mxu0 0.0
  %129 = vmatprep.subr.mxu0 0.0
  %130 = vmatpush1.msra.mxu0 0.0
  %131 = vmatprep.subr.mxu0 0.0
  %132 = vmatpush1.msra.mxu0 0.0
  %133 = vmatprep.subr.mxu0 0.0
  %134 = vmatpush1.msra.mxu0 0.0
  %135 = vmatprep.subr.mxu0 0.0
  %136 = vmatpush1.msra.mxu0 0.0
  %137 = vmatprep.subr.mxu0 0.0
  %138 = vmatpush1.msra.mxu0 0.0
  %139 = vmatprep.subr.mxu0 0.0
  %140 = vmatpush1.msra.mxu0 0.0
  %141 = vmatprep.subr.mxu0 0.0
  %142 = vmatpush1.msra.mxu0 0.0
  %143 = vmatprep.subr.mxu0 0.0
  %144 = vmatpush1.msra.mxu0 0.0
  %145 = vmatprep.subr.mxu0 0.0
  %146 = vmatpush1.msra.mxu0 0.0
  %147 = vmatprep.subr.mxu0 0.0
  %148 = vmatpush1.msra.mxu0 0.0
  %149 = vmatprep.subr.mxu0 0.0
  %150 = vmatpush1.msra.mxu0 0.0
  %151 = vmatprep.subr.mxu0 0.0
  %152 = vmatpush1.msra.mxu0 0.0
  %153 = vmatprep.subr.mxu0 0.0
  %154 = vmatpush1.msra.mxu0 0.0
  %155 = vmatprep.mubr.f32.mxu0 0.0
  %156 = vmatmul.mubr.f32.gmra.mrb[0].mxu0 %v40
  %v157 = vpop.f32.mrb[0].mxu0
  %v158 = vadd.f32 %v36, %v157
  %v159 = vpop.f32.mrb[0].mxu0
  %160 = vmatprep.mubr.f32.mxu0 0.0
  %161 = vmatmul.mubr.f32.gmra.mrb[0].mxu0 %v43
  %v162 = vpop.f32.mrb[0].mxu0
  %v163 = vadd.f32 %v36, %v162
  %v164 = vpop.f32.mrb[0].mxu0
  %165 = vmatprep.mubr.f32.mxu0 0.0
  %166 = vmatmul.mubr.f32.gmra.mrb[0].mxu0 %v46
  %v167 = vpop.f32.mrb[0].mxu0
  %v168 = vadd.f32 %v36, %v167
  %v169 = vpop.f32.mrb[0].mxu0
  %170 = vmatprep.mubr.f32.mxu0 0.0
  %171 = vmatmul.mubr.f32.gmra.mrb[0].mxu0 %v49
  %v172 = vpop.f32.mrb[0].mxu0
  %v173 = vadd.f32 %v36, %v172
  %v174 = vpop.f32.mrb[0].mxu0
  %175 = vmatprep.mubr.f32.mxu0 0.0
  %176 = vmatmul.mubr.f32.gmra.mrb[0].mxu0 %v52
  %v177 = vpop.f32.mrb[0].mxu0
  %v178 = vadd.f32 %v36, %v177
  %v179 = vpop.f32.mrb[0].mxu0
  %180 = vmatprep.mubr.f32.mxu0 0.0
  %181 = vmatmul.mubr.f32.gmra.mrb[0].mxu0 %v55
  %v182 = vpop.f32.mrb[0].mxu0
  %v183 = vadd.f32 %v36, %v182
  %v184 = vpop.f32.mrb[0].mxu0
  %185 = vmatprep.mubr.f32.mxu0 0.0
  %186 = vmatmul.mubr.f32.gmra.mrb[0].mxu0 %v58
  %v187 = vpop.f32.mrb[0].mxu0
  %v188 = vadd.f32 %v36, %v187
  %v189 = vpop.f32.mrb[0].mxu0
  %190 = vmatprep.mubr.f32.mxu0 0.0
  %191 = vmatmul.mubr.f32.gmra.mrb[0].mxu0 %v61
  %v192 = vpop.f32.mrb[0].mxu0
  %v193 = vadd.f32 %v36, %v192
  %v194 = vpop.f32.mrb[0].mxu0
  %195 = vmatprep.mubr.f32.mxu0 0.0
  %196 = vmatmul.mubr.f32.gmra.mrb[0].mxu0 %v64
  %v197 = vpop.f32.mrb[0].mxu0
  %v198 = vadd.f32 %v36, %v197
  %v199 = vpop.f32.mrb[0].mxu0
  %200 = vmatprep.mubr.f32.mxu0 0.0
  %201 = vmatmul.mubr.f32.gmra.mrb[0].mxu0 %v67
  %v202 = vpop.f32.mrb[0].mxu0
  %v203 = vadd.f32 %v36, %v202
  %v204 = vpop.f32.mrb[0].mxu0
  %205 = vmatprep.mubr.f32.mxu0 0.0
  %206 = vmatmul.mubr.f32.gmra.mrb[0].mxu0 %v70
  %v207 = vpop.f32.mrb[0].mxu0
  %v208 = vadd.f32 %v36, %v207
  %v209 = vpop.f32.mrb[0].mxu0
  %210 = vmatprep.mubr.f32.mxu0 0.0
  %211 = vmatmul.mubr.f32.gmra.mrb[0].mxu0 %v73
  %v212 = vpop.f32.mrb[0].mxu0
  %v213 = vadd.f32 %v36, %v212
  %v214 = vpop.f32.mrb[0].mxu0
  %215 = vmatprep.mubr.f32.mxu0 0.0
  %216 = vmatmul.mubr.f32.gmra.mrb[0].mxu0 %v76
  %v217 = vpop.f32.mrb[0].mxu0
  %v218 = vadd.f32 %v36, %v217
  %v219 = vpop.f32.mrb[0].mxu0
  %220 = vmatprep.mubr.f32.mxu0 0.0
  %221 = vmatmul.mubr.f32.gmra.mrb[0].mxu0 %v79
  %v222 = vpop.f32.mrb[0].mxu0
  %v223 = vadd.f32 %v36, %v222
  %v224 = vpop.f32.mrb[0].mxu0
  %225 = vmatprep.mubr.f32.mxu0 0.0
  %226 = vmatmul.mubr.f32.gmra.mrb[0].mxu0 %v82
  %v227 = vpop.f32.mrb[0].mxu0
  %v228 = vadd.f32 %v36, %v227
  %v229 = vpop.f32.mrb[0].mxu0
  %230 = vmatprep.mubr.f32.mxu0 0.0
  %231 = vmatmul.mubr.f32.gmra.mrb[0].mxu0 %v85
  %v232 = vpop.f32.mrb[0].mxu0
  %v233 = vadd.f32 %v36, %v232
  %v234 = vpop.f32.mrb[0].mxu0
  %235 = vdwg.mxu0
  %vm236 = vcmask 261120
  %237 = vst.msk [vmem:[%s3] sm:$0xff] %vm236, %v158
  %238 = vst.msk [vmem:[%s3 + $0x8] sm:$0xff] %vm236, %v163
  %239 = vst.msk [vmem:[%s3 + $0x10] sm:$0xff] %vm236, %v168
  %240 = vst.msk [vmem:[%s3 + $0x18] sm:$0xff] %vm236, %v173
  %241 = vst.msk [vmem:[%s3 + $0x20] sm:$0xff] %vm236, %v178
  %242 = vst.msk [vmem:[%s3 + $0x28] sm:$0xff] %vm236, %v183
  %243 = vst.msk [vmem:[%s3 + $0x30] sm:$0xff] %vm236, %v188
  %244 = vst.msk [vmem:[%s3 + $0x38] sm:$0xff] %vm236, %v193
  %245 = vst.msk [vmem:[%s3 + $0x40] sm:$0xff] %vm236, %v198
  %246 = vst.msk [vmem:[%s3 + $0x48] sm:$0xff] %vm236, %v203
  %247 = vst.msk [vmem:[%s3 + $0x50] sm:$0xff] %vm236, %v208
  %248 = vst.msk [vmem:[%s3 + $0x58] sm:$0xff] %vm236, %v213
  %249 = vst.msk [vmem:[%s3 + $0x60] sm:$0xff] %vm236, %v218
  %250 = vst.msk [vmem:[%s3 + $0x68] sm:$0xff] %vm236, %v223
  %251 = vst.msk [vmem:[%s3 + $0x70] sm:$0xff] %vm236, %v228
  %252 = vst.msk [vmem:[%s3 + $0x78] sm:$0xff] %vm236, %v233
  // Predicated region
  $region14: #{tpu_custom_call.1} parent=0 // pred_check
    _
  $region15: #{tpu_custom_call.1} parent=0 // pred_check_branch
    %254 = sbr.rel (0) target = $region17
  $region16: #{tpu_custom_call.1} parent=0 // pred_region
    _
  $region17: #{tpu_custom_call.1} parent=0 // pred_fallthru
    _
  // Predicated region
  $region18: #{tpu_custom_call.1} parent=0 // pred_check
    _
  $region19: #{tpu_custom_call.1} parent=0 // pred_check_branch
    %256 = sbr.rel (0) target = $region21
  $region20: #{tpu_custom_call.1} parent=0 // pred_region
    _
  $region21: #{tpu_custom_call.1} parent=0 // pred_fallthru
    _

</llo_original>
